<compile_context>
chip_gen: v7x
topology: tpu7x:2x2x1
jax: 0.10.0
libtpu: 0.0.40
codegen_flags: <defaults>
</compile_context>

<pallas_src>
import functools

import jax
import jax.numpy as jnp
from jax.experimental import pallas as pl
from jax.experimental.pallas import tpu as pltpu


def _rope_angle_add_kernel(freq_ref, cos_off_ref, sin_off_ref,
                           cos_ref, sin_ref, *, pos_per_step):
    """One output tile of the cos/sin tables via angle addition.

    freq_ref:                (1, W) f32   per-lane inv_freq (duplicated halves
                                          / packed positions).
    cos_off_ref/sin_off_ref: (tile, W) f32 cos/sin of the in-tile offset angles
                                          r * inv_freq (constant across grid).
    cos_ref/sin_ref:         (tile, W)    output tiles, dtype == x.dtype.
    """
    # Base angle of this tile's first sequence position, per lane.  Only this
    # single row goes through the (expensive, VALU-polynomial) sin/cos.
    row0 = (pl.program_id(0) * pos_per_step).astype(jnp.float32)
    base = row0 * freq_ref[...]                       # (1, W) f32
    cos_b = jnp.cos(base)
    sin_b = jnp.sin(base)

    cos_o = cos_off_ref[...]                          # (tile, W) f32
    sin_o = sin_off_ref[...]

    # cos(a+b) = cos(a)cos(b) - sin(a)sin(b) ; sin(a+b) = sin(a)cos(b)+cos(a)sin(b)
    # 4 mul + 2 add per element (VPU), one cast, one full-lane unmasked store.
    cos_ref[...] = (cos_o * cos_b - sin_o * sin_b).astype(cos_ref.dtype)
    sin_ref[...] = (sin_o * cos_b + cos_o * sin_b).astype(sin_ref.dtype)


def _round_up(n, m):
    return ((n + m - 1) // m) * m


def _pick_tile(n_rows, tile_rows):
    """Row-tile: multiple of 8 (or the full extent), capped at tile_rows,
    chosen so the grid has >=2 steps whenever possible (v7x has 2 TCs)."""
    if n_rows <= 8:
        return n_rows
    two_way = _round_up(-(-n_rows // 2), 8)           # cdiv(n_rows, 2) -> mult of 8
    tile = min(max(8, (tile_rows // 8) * 8), two_way)
    return min(tile, n_rows)


@functools.lru_cache(maxsize=None)
def _rope_tables(dim, base, pack, tile):
    """Host-side constant tables (cached across calls).

    Returns (freq_lane (1, W), cos_off (tile, W), sin_off (tile, W)) with
    W = pack*dim; `pack` consecutive positions share one packed row.
    """
    inv_freq = 1.0 / (base ** (jnp.arange(0, dim, 2, dtype=jnp.float32) / dim))
    inv_full = jnp.concatenate([inv_freq, inv_freq])            # (dim,) = cat(f, f)
    r = jnp.arange(tile, dtype=jnp.float32)[:, None]            # (tile, 1)
    if pack > 1:
        freq_lane = jnp.tile(inv_full, pack)                    # (pack*dim,)
        k_lane = jnp.repeat(jnp.arange(pack, dtype=jnp.float32), dim)
        off_pos = r * float(pack) + k_lane[None, :]             # exact ints in f32
        off = off_pos * freq_lane[None, :]
    else:
        freq_lane = inv_full
        off = r * freq_lane[None, :]
    return (freq_lane.reshape(1, -1),
            jnp.cos(off).astype(jnp.float32),
            jnp.sin(off).astype(jnp.float32))


def llama_rotary_embedding(x, seq_len, dim, base=10000.0, tile_rows=1024):
    """Pallas equivalent of LlamaRotaryEmbedding(dim)(x, seq_len=seq_len).

    Returns (cos, sin), each (1, 1, seq_len, dim) with dtype == x.dtype.
    """
    out_dtype = x.dtype
    cparams = pltpu.CompilerParams(dimension_semantics=("parallel",))

    # Lane packing for small head dims so the output last dim is 128 lanes
    # (unmasked full-width stores); falls back to dim-wide rows otherwise.
    if dim < 128 and 128 % dim == 0 and seq_len % (128 // dim) == 0:
        pack = 128 // dim
    else:
        pack = 1
    n_rows = seq_len // pack
    w = pack * dim

    tile = _pick_tile(n_rows, tile_rows)
    grid = (pl.cdiv(n_rows, tile),)
    freq_lane, cos_off, sin_off = _rope_tables(dim, float(base), pack, tile)

    out_sd = jax.ShapeDtypeStruct((n_rows, w), out_dtype)
    kernel = functools.partial(_rope_angle_add_kernel, pos_per_step=tile * pack)
    cos, sin = pl.pallas_call(
        kernel,
        out_shape=(out_sd, out_sd),
        grid=grid,
        in_specs=[pl.BlockSpec((1, w), lambda i: (0, 0)),       # freq_lane
                  pl.BlockSpec((tile, w), lambda i: (0, 0)),    # cos_off (const)
                  pl.BlockSpec((tile, w), lambda i: (0, 0))],   # sin_off (const)
        out_specs=(pl.BlockSpec((tile, w), lambda i: (i, 0)),
                   pl.BlockSpec((tile, w), lambda i: (i, 0))),
        compiler_params=cparams,
    )(freq_lane, cos_off, sin_off)

    # Packed rows -> (seq_len, dim) is pure layout plumbing in the wrapper.
    cos = cos.reshape(seq_len, dim)
    sin = sin.reshape(seq_len, dim)
    return cos[None, None, :, :], sin[None, None, :, :]


def _reference(x, seq_len, dim, base=10000.0):
    inv_freq = 1.0 / (base ** (jnp.arange(0, dim, 2, dtype=jnp.float32) / dim))
    t = jnp.arange(seq_len, dtype=jnp.float32)
    freqs = jnp.einsum("i,j->ij", t, inv_freq)
    emb = jnp.concatenate([freqs, freqs], axis=-1)
    return (jnp.cos(emb)[None, None].astype(x.dtype),
            jnp.sin(emb)[None, None].astype(x.dtype))


if __name__ == "__main__":
    key = jax.random.PRNGKey(0)
    batch, n_heads = 2, 4

    # Case 1: small head_dim (< 128) -> lane-packed path, single tile.
    seq_len1, dim1 = 8, 32
    x1 = jax.random.normal(key, (batch, n_heads, seq_len1, dim1), dtype=jnp.float32)
    cos1, sin1 = jax.block_until_ready(
        llama_rotary_embedding(x1, seq_len=seq_len1, dim=dim1))
    cos1_ref, sin1_ref = _reference(x1, seq_len1, dim1)
    assert cos1.shape == (1, 1, seq_len1, dim1) and sin1.shape == (1, 1, seq_len1, dim1)
    assert cos1.dtype == x1.dtype and sin1.dtype == x1.dtype
    assert jnp.allclose(cos1, cos1_ref, atol=1e-5, rtol=1e-5)
    assert jnp.allclose(sin1, sin1_ref, atol=1e-5, rtol=1e-5)

    # Case 2: Llama-2 head_dim=128 -> full-lane angle-addition path, 2 tiles.
    seq_len2, dim2 = 16, 128
    x2 = jax.random.normal(key, (batch, n_heads, seq_len2, dim2), dtype=jnp.float32)
    cos2, sin2 = jax.block_until_ready(
        llama_rotary_embedding(x2, seq_len=seq_len2, dim=dim2))
    cos2_ref, sin2_ref = _reference(x2, seq_len2, dim2)
    assert cos2.shape == (1, 1, seq_len2, dim2)
    assert jnp.allclose(cos2, cos2_ref, atol=1e-5, rtol=1e-5)
    assert jnp.allclose(sin2, sin2_ref, atol=1e-5, rtol=1e-5)

    # Case 3: longer sequence, multi-tile grid (both TCs busy on v7x).
    seq_len3, dim3 = 160, 128
    x3 = jax.random.normal(key, (batch, n_heads, seq_len3, dim3), dtype=jnp.float32)
    cos3, sin3 = jax.block_until_ready(
        llama_rotary_embedding(x3, seq_len=seq_len3, dim=dim3))
    cos3_ref, sin3_ref = _reference(x3, seq_len3, dim3)
    assert cos3.shape == (1, 1, seq_len3, dim3)
    # Angle-split rounding grows with the angle magnitude (~eps * seq_len).
    assert jnp.allclose(cos3, cos3_ref, atol=1e-4, rtol=1e-4)
    assert jnp.allclose(sin3, sin3_ref, atol=1e-4, rtol=1e-4)

    print("KERNEL_OK")
</pallas_src>

<mosaic_0001>
module attributes {stable_mosaic.version = 11 : i64} {
  func.func @_rope_angle_add_kernel(%arg0: i32, %arg1: memref<1x128xf32, #tpu.memory_space<vmem>>, %arg2: memref<2x128xf32, #tpu.memory_space<vmem>>, %arg3: memref<2x128xf32, #tpu.memory_space<vmem>>, %arg4: memref<2x128xf32, #tpu.memory_space<vmem>>, %arg5: memref<2x128xf32, #tpu.memory_space<vmem>>) attributes {dimension_semantics = [#tpu.dimension_semantics<parallel>], iteration_bounds = array<i64: 1>, scalar_prefetch = 0 : i64, scratch_operands = 0 : i64, tpu.core_type = #tpu.core_type<tc>, window_params = [{pipeline_mode = #tpu.pipeline_mode<synchronous>, transform_indices = @transform_0, window_bounds = array<i64: 1, 128>}, {pipeline_mode = #tpu.pipeline_mode<synchronous>, transform_indices = @transform_1, window_bounds = array<i64: 2, 128>}, {pipeline_mode = #tpu.pipeline_mode<synchronous>, transform_indices = @transform_2, window_bounds = array<i64: 2, 128>}, {transform_indices = @transform_3, window_bounds = array<i64: 2, 128>}, {transform_indices = @transform_4, window_bounds = array<i64: 2, 128>}]} {
    %c8_i32 = arith.constant 8 : i32
    %0 = arith.muli %arg0, %c8_i32 : i32
    %1 = arith.sitofp %0 : i32 to f32
    %c0 = arith.constant 0 : index
    %c0_0 = arith.constant 0 : index
    %2 = vector.load %arg1[%c0, %c0_0] : memref<1x128xf32, #tpu.memory_space<vmem>>, vector<1x128xf32>
    %3 = vector.broadcast %1 : f32 to vector<1x128xf32>
    %4 = arith.mulf %3, %2 : vector<1x128xf32>
    %5 = math.cos %4 : vector<1x128xf32>
    %6 = math.sin %4 : vector<1x128xf32>
    %c0_1 = arith.constant 0 : index
    %c0_2 = arith.constant 0 : index
    %7 = vector.load %arg2[%c0_1, %c0_2] : memref<2x128xf32, #tpu.memory_space<vmem>>, vector<2x128xf32>
    %c0_3 = arith.constant 0 : index
    %c0_4 = arith.constant 0 : index
    %8 = vector.load %arg3[%c0_3, %c0_4] : memref<2x128xf32, #tpu.memory_space<vmem>>, vector<2x128xf32>
    %9 = vector.broadcast %5 : vector<1x128xf32> to vector<2x128xf32>
    %10 = arith.mulf %7, %9 : vector<2x128xf32>
    %11 = vector.broadcast %6 : vector<1x128xf32> to vector<2x128xf32>
    %12 = arith.mulf %8, %11 : vector<2x128xf32>
    %13 = arith.subf %10, %12 : vector<2x128xf32>
    %c0_5 = arith.constant 0 : index
    %c0_6 = arith.constant 0 : index
    %14 = vector.load %arg4[%c0_5, %c0_6] : memref<2x128xf32, #tpu.memory_space<vmem>>, vector<2x128xf32>
    tpu.vector_store %arg4[%c0_5, %c0_6], %13 {strides = array<i32>} : memref<2x128xf32, #tpu.memory_space<vmem>>, vector<2x128xf32>,
    %15 = vector.broadcast %5 : vector<1x128xf32> to vector<2x128xf32>
    %16 = arith.mulf %8, %15 : vector<2x128xf32>
    %17 = vector.broadcast %6 : vector<1x128xf32> to vector<2x128xf32>
    %18 = arith.mulf %7, %17 : vector<2x128xf32>
    %19 = arith.addf %16, %18 : vector<2x128xf32>
    %c0_7 = arith.constant 0 : index
    %c0_8 = arith.constant 0 : index
    %20 = vector.load %arg5[%c0_7, %c0_8] : memref<2x128xf32, #tpu.memory_space<vmem>>, vector<2x128xf32>
    tpu.vector_store %arg5[%c0_7, %c0_8], %19 {strides = array<i32>} : memref<2x128xf32, #tpu.memory_space<vmem>>, vector<2x128xf32>,
    return
  }
  func.func @transform_0(%arg0: i32) -> (i32, i32) {
    %c0_i32 = arith.constant 0 : i32
    %c0_i32_0 = arith.constant 0 : i32
    %c0_i32_1 = arith.constant 0 : i32
    return %c0_i32, %c0_i32_0 : i32, i32
  }
  func.func @transform_1(%arg0: i32) -> (i32, i32) {
    %c0_i32 = arith.constant 0 : i32
    %c0_i32_0 = arith.constant 0 : i32
    %c0_i32_1 = arith.constant 0 : i32
    return %c0_i32, %c0_i32_0 : i32, i32
  }
  func.func @transform_2(%arg0: i32) -> (i32, i32) {
    %c0_i32 = arith.constant 0 : i32
    %c0_i32_0 = arith.constant 0 : i32
    %c0_i32_1 = arith.constant 0 : i32
    return %c0_i32, %c0_i32_0 : i32, i32
  }
  func.func @transform_3(%arg0: i32) -> (i32, i32) {
    %c0_i32 = arith.constant 0 : i32
    %c0_i32_0 = arith.constant 0 : i32
    return %arg0, %c0_i32 : i32, i32
  }
  func.func @transform_4(%arg0: i32) -> (i32, i32) {
    %c0_i32 = arith.constant 0 : i32
    %c0_i32_0 = arith.constant 0 : i32
    return %arg0, %c0_i32 : i32, i32
  }
}

</mosaic_0001>

<llo_original>
// kernel: tpu_custom_call.1
$region0: #{tpu_custom_call.1}
  #allocation0 [shape = 'u32[]', space=smem, size = 0x4, offset = 0x4, fixed_abs, tag = 'smem constant byte address 0x4 - core index']
  #allocation1 [shape = 'u32[144,128]{1,0:T(1,128)}', space=vmem, size = 0x12000, scoped, tag = 'internal scratch']
  %s0 = inlined_call_operand.hbm [shape: f32[1,128], index: 0, kind: input, shape index: {}]
  %s1 = inlined_call_operand.vmem [shape: f32[2,128], index: 1, kind: input, shape index: {}]
  %s2 = inlined_call_operand.vmem [shape: f32[2,128], index: 2, kind: input, shape index: {}]
  %s3 = inlined_call_operand.hbm [shape: f32[2,128], index: 3, kind: output, shape index: {0}]
  %s4 = inlined_call_operand.hbm [shape: f32[2,128], index: 4, kind: output, shape index: {1}]
  %5 = xla_tuple %s3, %s4
  %s6 = sld [smem:[#allocation0]]
  $region34: #{tpu_custom_call.1} parent=0
    _
  %s8 = ssub.s32 1, %s6
  %s9 = scalar_select 0, %s8, %s6
  $region1: #{tpu_custom_call.1} parent=0
    #allocation2 [shape = 'u8[512]{0}', space=vmem, size = 0x400, scoped, tag = 'input window, operand 0, single buffered']
    #allocation3 [shape = 's32[1]{0}', space=sflag, size = 0x4, scoped, tag = 'scoped memory for tpu_custom_call.1']
    #allocation4 [shape = 's32[1]{0}', space=sflag, size = 0x4, scoped, tag = 'scoped memory for tpu_custom_call.1']
    #allocation5 [shape = 'u8[1024]{0}', space=vmem, size = 0x400, scoped, tag = 'output window, operand 0, single buffered']
    #allocation6 [shape = 'u8[1024]{0}', space=vmem, size = 0x400, scoped, tag = 'output window, operand 1, single buffered']
    #allocation7 [shape = 's32[1]{0}', space=sflag, size = 0x4, scoped, tag = 'scoped memory for tpu_custom_call.1']
    %10 = vsyncpa [#allocation3], 0
    %11 = vsyncpa [#allocation4], 0
    %12 = vsyncpa [#allocation7], 0
    // Predicated region
    $region2: #{tpu_custom_call.1} parent=1 // pred_check
      _
    $region3: #{tpu_custom_call.1} parent=1 // pred_check_branch
      %14 = sbr.rel (0) target = $region5
    $region4: #{tpu_custom_call.1} parent=1 // pred_region
      %s16 = ssub.s32 16, 16
      %17 = vsyncadd [#allocation3], %s16
      %s19 = sshll.u32 [#allocation2], 4
      %s20 = int_to_ptr.vmem [resolvable:$true] %s19
      %22 = dma.hbm_to_vmem [thread:$0]  %s0, 16, %s20, [#allocation3]
    $region5: #{tpu_custom_call.1} parent=1 // pred_fallthru
      _
    // Predicated region
    $region6: #{tpu_custom_call.1} parent=1 // pred_check
      _
    $region7: #{tpu_custom_call.1} parent=1 // pred_check_branch
      %24 = sbr.rel (0) target = $region9
    $region8: #{tpu_custom_call.1} parent=1 // pred_region
      _
    $region9: #{tpu_custom_call.1} parent=1 // pred_fallthru
      _
    // Predicated region
    $region10: #{tpu_custom_call.1} parent=1 // pred_check
      _
    $region11: #{tpu_custom_call.1} parent=1 // pred_check_branch
      %26 = sbr.rel (0) target = $region13
    $region12: #{tpu_custom_call.1} parent=1 // pred_region
      _
    $region13: #{tpu_custom_call.1} parent=1 // pred_fallthru
      _
    // Predicated region
    $region14: #{tpu_custom_call.1} parent=1 // pred_check
      _
    $region15: #{tpu_custom_call.1} parent=1 // pred_check_branch
      %28 = sbr.rel (0) target = $region17
    $region16: #{tpu_custom_call.1} parent=1 // pred_region
      %29 = dma.done [#allocation3], 16
    $region17: #{tpu_custom_call.1} parent=1 // pred_fallthru
      _
    %s30 = smul.u32 0, 8
    %s31 = scvt.s32.f32 %s30
    %v32 = vld [vmem:[#allocation2] sm:$0x1]
    %v33 = vstv %s31
    %v34 = vmul.f32 %v33, %v32
    %v35 = vand.u32 2147483647, %v34
    %vm36 = vcmp.le.f32.partialorder %v35, 0.7853982
    %vm37 = vcmp.lt.s32.totalorder %v34, 0
    %v38 = vand.u32 %v34, 2139095040
    %v39 = vshrl.u32 %v38, 23
    %v40 = vsub.s32 %v39, 127
    %v41 = vand.u32 2147483647, %v34
    %v42 = vand.u32 %v41, 8388607
    %v43 = vor.u32 %v42, 8388608
    %v44 = vsub.s32 0, %v43
    %v45 = vadd.s32 %v40, 1
    %vm46 = vcmp.gt.s32.totalorder %v45, 0
    %v47 = vsel %vm46, %v45, 0
    %v48 = vshrl.u32 %v47, 5
    %v49 = vand.u32 %v47, 31
    %v50 = vsub.s32 32, %v49
    %v51 = vshrl.u32 683565275, %v50
    %v52 = vshll.u32 683565275, %v49
    %v53 = vshrl.u32 2475754826, %v50
    %v54 = vor.u32 %v52, %v53
    %v55 = vshll.u32 2475754826, %v49
    %v56 = vshrl.u32 2131351028, %v50
    %v57 = vor.u32 %v55, %v56
    %v58 = vshll.u32 2131351028, %v49
    %v59 = vshrl.u32 2102212464, %v50
    %v60 = vor.u32 %v58, %v59
    %v61 = vshll.u32 2102212464, %v49
    %v62 = vshrl.u32 920167782, %v50
    %v63 = vor.u32 %v61, %v62
    %v64 = vshll.u32 920167782, %v49
    %v65 = vshrl.u32 1326507024, %v50
    %v66 = vor.u32 %v64, %v65
    %vm67 = vcmp.lt.s32.totalorder %v48, 1
    %vm68 = vcmp.lt.s32.totalorder %v48, 2
    %vm69 = vcmp.lt.s32.totalorder %v48, 3
    %vm70 = vcmp.lt.s32.totalorder %v48, 4
    %v71 = vsel %vm67, %v51, %v54
    %v72 = vsel %vm70, %v60, 2102212464
    %v73 = vsel %vm69, %v57, %v72
    %v74 = vsel %vm68, %v71, %v73
    %v75 = vsel %vm67, %v54, %v57
    %v76 = vsel %vm70, %v63, 920167782
    %v77 = vsel %vm69, %v60, %v76
    %v78 = vsel %vm68, %v75, %v77
    %v79 = vsel %vm67, %v57, %v60
    %v80 = vsel %vm70, %v66, 1326507024
    %v81 = vsel %vm69, %v63, %v80
    %v82 = vsel %vm68, %v79, %v81
    %v83 = vshll.u32 %v43, 8
    %v84 = vmul.u32.u64.compose %v83, %v82
    %v85 = vextract.low.u32 %v84
    %v86 = vextract.high.u32 %v84
    %v87 = vmul.u32.u64.compose %v83, %v78
    %v88 = vextract.low.u32 %v87
    %v89 = vextract.high.u32 %v87
    %v90 = vmul.u32 %v83, %v74
    %v91 = vadd.s32 %v86, %v88
    %vm92 = vc.u32 %v86, %v88
    %v93 = vadd.s32 %v89, 1
    %v94 = vsel %vm92, %v93, %v89
    %v95 = vadd.s32 %v90, %v94
    %v96 = vadd.s32 %v95, 536870912
    %v97 = vshrl.u32 %v96, 30
    %v98 = vshll.u32 %v97, 30
    %v99 = vsub.s32 %v95, %v98
    %vm100 = vcmp.lt.s32.totalorder %v99, 0
    %v101 = vsub.s32 0, %v99
    %v102 = vsel %vm100, %v101, %v99
    %v103 = vclz %v102
    %v104 = vsub.s32 %v103, 2
    %vm105 = vcmp.gt.s32.totalorder 0, %v104
    %v106 = vsel %vm105, 0, %v104
    %v107 = vsub.s32 32, %v106
    %v108 = vshll.u32 %v99, %v106
    %v109 = vshrl.u32 %v91, %v107
    %v110 = vor.u32 %v108, %v109
    %v111 = vsub.s32 4294967266, %v106
    %v112 = vadd.s32 %v111, 127
    %v113 = vshll.u32 %v112, 23
    %v114 = vor.u32 4788187, %v113
    %v115 = vand.u32 2147483647, %v114
    %v117 = vcvt.s32.f32 %v110
    %v118 = vmul.f32 %v117, %v115
    %v119 = vxor.u32 %v118, 2147483648
    %v120 = vsel %vm37, %v119, %v118
    %v121 = vsub.s32 4, %v97
    %v122 = vsel %vm37, %v121, %v97
    %v123 = vsel %vm36, %v34, %v120
    %v124 = vsel %vm36, 0, %v122
    %v125 = vcosq.f32.pop %v123
    %v126 = vsinq.f32.pop %v123
    %vm127 = vweird.f32 %v34
    %v128 = vand.u32 %v124, 3
    %vm129 = vcmp.lt.s32.totalorder %v128, 2
    %vm130 = vcmp.eq.s32.totalorder %v128, 0
    %v131 = vxor.u32 %v126, 2147483648
    %v132 = vsel %vm130, %v125, %v131
    %vm133 = vcmp.eq.s32.totalorder %v128, 2
    %v134 = vxor.u32 %v125, 2147483648
    %v135 = vsel %vm133, %v134, %v126
    %v136 = vsel %vm129, %v132, %v135
    %v137 = vsel %vm127, nan, %v136
    %v138 = vand.u32 2147483647, %v34
    %vm139 = vcmp.le.f32.partialorder %v138, 0.7853982
    %vm140 = vcmp.lt.s32.totalorder %v34, 0
    %v141 = vand.u32 %v34, 2139095040
    %v142 = vshrl.u32 %v141, 23
    %v143 = vsub.s32 %v142, 127
    %v144 = vand.u32 2147483647, %v34
    %v145 = vand.u32 %v144, 8388607
    %v146 = vor.u32 %v145, 8388608
    %v147 = vsub.s32 0, %v146
    %v148 = vadd.s32 %v143, 1
    %vm149 = vcmp.gt.s32.totalorder %v148, 0
    %v150 = vsel %vm149, %v148, 0
    %v151 = vshrl.u32 %v150, 5
    %v152 = vand.u32 %v150, 31
    %v153 = vsub.s32 32, %v152
    %v154 = vshrl.u32 683565275, %v153
    %v155 = vshll.u32 683565275, %v152
    %v156 = vshrl.u32 2475754826, %v153
    %v157 = vor.u32 %v155, %v156
    %v158 = vshll.u32 2475754826, %v152
    %v159 = vshrl.u32 2131351028, %v153
    %v160 = vor.u32 %v158, %v159
    %v161 = vshll.u32 2131351028, %v152
    %v162 = vshrl.u32 2102212464, %v153
    %v163 = vor.u32 %v161, %v162
    %v164 = vshll.u32 2102212464, %v152
    %v165 = vshrl.u32 920167782, %v153
    %v166 = vor.u32 %v164, %v165
    %v167 = vshll.u32 920167782, %v152
    %v168 = vshrl.u32 1326507024, %v153
    %v169 = vor.u32 %v167, %v168
    %vm170 = vcmp.lt.s32.totalorder %v151, 1
    %vm171 = vcmp.lt.s32.totalorder %v151, 2
    %vm172 = vcmp.lt.s32.totalorder %v151, 3
    %vm173 = vcmp.lt.s32.totalorder %v151, 4
    %v174 = vsel %vm170, %v154, %v157
    %v175 = vsel %vm173, %v163, 2102212464
    %v176 = vsel %vm172, %v160, %v175
    %v177 = vsel %vm171, %v174, %v176
    %v178 = vsel %vm170, %v157, %v160
    %v179 = vsel %vm173, %v166, 920167782
    %v180 = vsel %vm172, %v163, %v179
    %v181 = vsel %vm171, %v178, %v180
    %v182 = vsel %vm170, %v160, %v163
    %v183 = vsel %vm173, %v169, 1326507024
    %v184 = vsel %vm172, %v166, %v183
    %v185 = vsel %vm171, %v182, %v184
    %v186 = vshll.u32 %v146, 8
    %v187 = vmul.u32.u64.compose %v186, %v185
    %v188 = vextract.low.u32 %v187
    %v189 = vextract.high.u32 %v187
    %v190 = vmul.u32.u64.compose %v186, %v181
    %v191 = vextract.low.u32 %v190
    %v192 = vextract.high.u32 %v190
    %v193 = vmul.u32 %v186, %v177
    %v194 = vadd.s32 %v189, %v191
    %vm195 = vc.u32 %v189, %v191
    %v196 = vadd.s32 %v192, 1
    %v197 = vsel %vm195, %v196, %v192
    %v198 = vadd.s32 %v193, %v197
    %v199 = vadd.s32 %v198, 536870912
    %v200 = vshrl.u32 %v199, 30
    %v201 = vshll.u32 %v200, 30
    %v202 = vsub.s32 %v198, %v201
    %vm203 = vcmp.lt.s32.totalorder %v202, 0
    %v204 = vsub.s32 0, %v202
    %v205 = vsel %vm203, %v204, %v202
    %v206 = vclz %v205
    %v207 = vsub.s32 %v206, 2
    %vm208 = vcmp.gt.s32.totalorder 0, %v207
    %v209 = vsel %vm208, 0, %v207
    %v210 = vsub.s32 32, %v209
    %v211 = vshll.u32 %v202, %v209
    %v212 = vshrl.u32 %v194, %v210
    %v213 = vor.u32 %v211, %v212
    %v214 = vsub.s32 4294967266, %v209
    %v215 = vadd.s32 %v214, 127
    %v216 = vshll.u32 %v215, 23
    %v217 = vor.u32 4788187, %v216
    %v218 = vand.u32 2147483647, %v217
    %v220 = vcvt.s32.f32 %v213
    %v221 = vmul.f32 %v220, %v218
    %v222 = vxor.u32 %v221, 2147483648
    %v223 = vsel %vm140, %v222, %v221
    %v224 = vsub.s32 4, %v200
    %v225 = vsel %vm140, %v224, %v200
    %v226 = vsel %vm139, %v34, %v223
    %v227 = vsel %vm139, 0, %v225
    %v228 = vcosq.f32.pop %v226
    %v229 = vsinq.f32.pop %v226
    %vm230 = vweird.f32 %v34
    %v231 = vadd.s32 %v227, 3
    %v232 = vand.u32 %v231, 3
    %vm233 = vcmp.lt.s32.totalorder %v232, 2
    %vm234 = vcmp.eq.s32.totalorder %v232, 0
    %v235 = vxor.u32 %v229, 2147483648
    %v236 = vsel %vm234, %v228, %v235
    %vm237 = vcmp.eq.s32.totalorder %v232, 2
    %v238 = vxor.u32 %v228, 2147483648
    %v239 = vsel %vm237, %v238, %v229
    %v240 = vsel %vm233, %v236, %v239
    %v241 = vsel %vm230, nan, %v240
    %v242 = vld [vmem:[%s1] sm:$0x3]
    %v243 = vld [vmem:[%s2] sm:$0x3]
    %v245 = vlaneseq
    %v246 = vshrl.u32 %v245, 7
    %v247 = vsub.s32 0, %v246
    %v248 = vrot.slane %v137, %v247
    %v250 = vmul.f32 %v242, %v248
    %v252 = vlaneseq
    %v253 = vshrl.u32 %v252, 7
    %v254 = vsub.s32 0, %v253
    %v255 = vrot.slane %v241, %v254
    %v257 = vmul.f32 %v243, %v255
    %v258 = vsub.f32 %v250, %v257
    %259 = vst [vmem:[#allocation5] sm:$0x3] %v258
    %v260 = vmul.f32 %v243, %v248
    %v261 = vmul.f32 %v242, %v255
    %v262 = vadd.f32 %v260, %v261
    %263 = vst [vmem:[#allocation6] sm:$0x3] %v262
    // Predicated region
    $region18: #{tpu_custom_call.1} parent=1 // pred_check
      _
    $region19: #{tpu_custom_call.1} parent=1 // pred_check_branch
      %265 = sbr.rel (0) target = $region21
    $region20: #{tpu_custom_call.1} parent=1 // pred_region
      %s267 = ssub.s32 32, 32
      %268 = vsyncadd [#allocation4], %s267
      %s270 = sshll.u32 [#allocation5], 4
      %s271 = int_to_ptr.vmem [resolvable:$true] %s270
      %273 = dma.vmem_to_hbm [thread:$0]  %s271, 32, %s3, [#allocation4]
    $region21: #{tpu_custom_call.1} parent=1 // pred_fallthru
      _
    // Predicated region
    $region22: #{tpu_custom_call.1} parent=1 // pred_check
      _
    $region23: #{tpu_custom_call.1} parent=1 // pred_check_branch
      %275 = sbr.rel (0) target = $region25
    $region24: #{tpu_custom_call.1} parent=1 // pred_region
      %s277 = ssub.s32 32, 32
      %278 = vsyncadd [#allocation7], %s277
      %s280 = sshll.u32 [#allocation6], 4
      %s281 = int_to_ptr.vmem [resolvable:$true] %s280
      %283 = dma.vmem_to_hbm [thread:$0]  %s281, 32, %s4, [#allocation7]
    $region25: #{tpu_custom_call.1} parent=1 // pred_fallthru
      _
    // Predicated region
    $region26: #{tpu_custom_call.1} parent=1 // pred_check
      _
    $region27: #{tpu_custom_call.1} parent=1 // pred_check_branch
      %285 = sbr.rel (0) target = $region29
    $region28: #{tpu_custom_call.1} parent=1 // pred_region
      %286 = dma.done [#allocation4], 32
    $region29: #{tpu_custom_call.1} parent=1 // pred_fallthru
      _
    // Predicated region
    $region30: #{tpu_custom_call.1} parent=1 // pred_check
      _
    $region31: #{tpu_custom_call.1} parent=1 // pred_check_branch
      %288 = sbr.rel (0) target = $region33
    $region32: #{tpu_custom_call.1} parent=1 // pred_region
      %289 = dma.done [#allocation7], 32
    $region33: #{tpu_custom_call.1} parent=1 // pred_fallthru
      _
    %290 = vsyncpa [#allocation3], 1
    %291 = vsyncpa [#allocation4], 1
    %292 = vsyncpa [#allocation7], 1

</llo_original>
